<compile_context>
chip_gen: v6e
topology: v6e:2x2x1
jax: 0.10.0
libtpu: 0.0.40
codegen_flags: <defaults>
</compile_context>

<pallas_src>
import jax
import jax.numpy as jnp
from jax.experimental import pallas as pl
from jax.experimental.pallas import tpu as pltpu


def _fused_linear_kernel(x_ref, w_ref, b_ref, out_ref):
    # Single fused matmul: bf16 operands on the MXU, f32 accumulation.
    x = x_ref[...].astype(jnp.bfloat16)
    acc = jnp.dot(x, w_ref[...], preferred_element_type=jnp.float32)
    out_ref[...] = (acc + b_ref[...]).astype(out_ref.dtype)


def complex_to_real(complex_x, params, *, tm=256):
    """complex_x: complex array of shape (..., d_in). Returns f32 (..., d_out)."""
    wr, br, wi, bi, wc, bc = (params[k] for k in
                              ("wr", "br", "wi", "bi", "wc", "bc"))
    d_in, d_out = wr.shape

    # ---- collapse the three linears into one affine map (exact) ----
    wc_r = wc[:d_out, :]                     # combine weight, real-branch half
    wc_i = wc[d_out:, :]                     # combine weight, imag-branch half
    a = wr @ wc_r                            # (d_in, d_out)
    b = wi @ wc_i                            # (d_in, d_out)
    c = br @ wc_r + bi @ wc_i + bc           # (d_out,)

    # Interleave rows of a/b so the packed (re, im, re, im, ...) input hits the
    # right weight rows: C[2k] = a[k], C[2k+1] = b[k].
    cw = jnp.stack([a, b], axis=1).reshape(2 * d_in, d_out)

    # ---- lane-dense output: pad output columns to a multiple of 128 ----
    n_pad = pl.cdiv(d_out, 128) * 128
    if n_pad != d_out:
        cw = jnp.pad(cw, ((0, 0), (0, n_pad - d_out)))
        c = jnp.pad(c, (0, n_pad - d_out))
    cw = cw.astype(jnp.bfloat16)             # MXU-native operand dtype
    c2 = c.reshape(1, n_pad).astype(jnp.float32)

    # ---- pack the complex input as interleaved (re, im) f32 on the lane dim ----
    lead_shape = complex_x.shape[:-1]
    xr = jnp.real(complex_x).astype(jnp.float32)
    xi = jnp.imag(complex_x).astype(jnp.float32)
    x_packed = jnp.stack([xr, xi], axis=-1).reshape(-1, 2 * d_in)   # (M, 2*d_in)
    m = x_packed.shape[0]

    # Row tile: large by default; clamp to a multiple of 8 (sublane granule)
    # for tiny inputs.  No row padding: Pallas masks the partial last block and
    # every output row depends only on its own input row.
    tm_eff = min(tm, ((m + 7) // 8) * 8)
    grid = (pl.cdiv(m, tm_eff),)

    out = pl.pallas_call(
        _fused_linear_kernel,
        out_shape=jax.ShapeDtypeStruct((m, n_pad), jnp.float32),
        grid=grid,
        in_specs=[
            pl.BlockSpec((tm_eff, 2 * d_in), lambda i: (i, 0)),   # packed rows
            pl.BlockSpec((2 * d_in, n_pad), lambda i: (0, 0)),    # fused weight
            pl.BlockSpec((1, n_pad), lambda i: (0, 0)),           # fused bias
        ],
        out_specs=pl.BlockSpec((tm_eff, n_pad), lambda i: (i, 0)),
        compiler_params=pltpu.CompilerParams(
            dimension_semantics=("parallel",)),
    )(x_packed, cw, c2)

    if n_pad != d_out:
        out = out[:, :d_out]
    return out.reshape(*lead_shape, d_out)


def init_params(key, input_dim, output_dim):
    """Deterministic init matching nn.Linear shapes (weights stored (in, out))."""
    ks = jax.random.split(key, 6)

    def u(k, shape, fan_in):
        bound = 1.0 / jnp.sqrt(fan_in)
        return jax.random.uniform(k, shape, jnp.float32, -bound, bound)

    return {
        "wr": u(ks[0], (input_dim, output_dim), input_dim),
        "br": u(ks[1], (output_dim,), input_dim),
        "wi": u(ks[2], (input_dim, output_dim), input_dim),
        "bi": u(ks[3], (output_dim,), input_dim),
        "wc": u(ks[4], (2 * output_dim, output_dim), 2 * output_dim),
        "bc": u(ks[5], (output_dim,), 2 * output_dim),
    }


def _reference(complex_x, params):
    """Pure-JAX f32 reference reproducing the PyTorch forward exactly."""
    real = jnp.real(complex_x).astype(jnp.float32)
    imag = jnp.imag(complex_x).astype(jnp.float32)
    r = real @ params["wr"] + params["br"]
    i = imag @ params["wi"] + params["bi"]
    comb = jnp.concatenate([r, i], axis=-1)
    return comb @ params["wc"] + params["bc"]


if __name__ == "__main__":
    key = jax.random.PRNGKey(0)
    k_re, k_im, k_p = jax.random.split(key, 3)

    batch, seq, input_dim, output_dim = 2, 8, 32, 32
    xr = jax.random.normal(k_re, (batch, seq, input_dim), jnp.float32)
    xi = jax.random.normal(k_im, (batch, seq, input_dim), jnp.float32)
    x = (xr + 1j * xi).astype(jnp.complex64)

    params = init_params(k_p, input_dim, output_dim)

    out = jax.block_until_ready(complex_to_real(x, params))
    ref = _reference(x, params)

    assert out.shape == (batch, seq, output_dim)
    # bf16 matmul operands (f32 accumulation) vs the pure-f32 reference.
    err = float(jnp.max(jnp.abs(out - ref)))
    assert jnp.allclose(out, ref, atol=2e-2, rtol=2e-2), err

    print("KERNEL_OK")
</pallas_src>

<mosaic_0001>
module attributes {stable_mosaic.version = 11 : i64} {
  func.func @_fused_linear_kernel(%arg0: i32, %arg1: memref<16x64xf32, #tpu.memory_space<vmem>>, %arg2: memref<64x128xbf16, #tpu.memory_space<vmem>>, %arg3: memref<1x128xf32, #tpu.memory_space<vmem>>, %arg4: memref<16x128xf32, #tpu.memory_space<vmem>>) attributes {dimension_semantics = [#tpu.dimension_semantics<parallel>], iteration_bounds = array<i64: 1>, scalar_prefetch = 0 : i64, scratch_operands = 0 : i64, tpu.core_type = #tpu.core_type<tc>, window_params = [{transform_indices = @transform_0, window_bounds = array<i64: 16, 64>}, {pipeline_mode = #tpu.pipeline_mode<synchronous>, transform_indices = @transform_1, window_bounds = array<i64: 64, 128>}, {pipeline_mode = #tpu.pipeline_mode<synchronous>, transform_indices = @transform_2, window_bounds = array<i64: 1, 128>}, {transform_indices = @transform_3, window_bounds = array<i64: 16, 128>}]} {
    %c0 = arith.constant 0 : index
    %c0_0 = arith.constant 0 : index
    %0 = vector.load %arg1[%c0, %c0_0] : memref<16x64xf32, #tpu.memory_space<vmem>>, vector<16x64xf32>
    %1 = arith.truncf %0 : vector<16x64xf32> to vector<16x64xbf16>
    %c0_1 = arith.constant 0 : index
    %c0_2 = arith.constant 0 : index
    %2 = vector.load %arg2[%c0_1, %c0_2] : memref<64x128xbf16, #tpu.memory_space<vmem>>, vector<64x128xbf16>
    %cst = arith.constant dense<0.000000e+00> : vector<16x128xf32>
    %3 = tpu.matmul %1, %2, %cst {dimension_numbers = #tpu.dot_dimension_numbers<[1], [0], [0], [1], [0, 0, 1, 1], [], []>} : vector<16x64xbf16>, vector<64x128xbf16>, vector<16x128xf32> -> vector<16x128xf32>
    %c0_3 = arith.constant 0 : index
    %c0_4 = arith.constant 0 : index
    %4 = vector.load %arg3[%c0_3, %c0_4] : memref<1x128xf32, #tpu.memory_space<vmem>>, vector<1x128xf32>
    %5 = vector.broadcast %4 : vector<1x128xf32> to vector<16x128xf32>
    %6 = arith.addf %3, %5 : vector<16x128xf32>
    %c0_5 = arith.constant 0 : index
    %c0_6 = arith.constant 0 : index
    %7 = vector.load %arg4[%c0_5, %c0_6] : memref<16x128xf32, #tpu.memory_space<vmem>>, vector<16x128xf32>
    tpu.vector_store %arg4[%c0_5, %c0_6], %6 {strides = array<i32>} : memref<16x128xf32, #tpu.memory_space<vmem>>, vector<16x128xf32>,
    return
  }
  func.func @transform_0(%arg0: i32) -> (i32, i32) {
    %c0_i32 = arith.constant 0 : i32
    %c0_i32_0 = arith.constant 0 : i32
    return %arg0, %c0_i32 : i32, i32
  }
  func.func @transform_1(%arg0: i32) -> (i32, i32) {
    %c0_i32 = arith.constant 0 : i32
    %c0_i32_0 = arith.constant 0 : i32
    %c0_i32_1 = arith.constant 0 : i32
    return %c0_i32, %c0_i32_0 : i32, i32
  }
  func.func @transform_2(%arg0: i32) -> (i32, i32) {
    %c0_i32 = arith.constant 0 : i32
    %c0_i32_0 = arith.constant 0 : i32
    %c0_i32_1 = arith.constant 0 : i32
    return %c0_i32, %c0_i32_0 : i32, i32
  }
  func.func @transform_3(%arg0: i32) -> (i32, i32) {
    %c0_i32 = arith.constant 0 : i32
    %c0_i32_0 = arith.constant 0 : i32
    return %arg0, %c0_i32 : i32, i32
  }
}

</mosaic_0001>

<llo_original>
// kernel: tpu_custom_call.1
$region0: #{tpu_custom_call.1}
  #allocation0 [shape = 'u32[]', space=smem, size = 0x4, offset = 0x4, fixed_abs, tag = 'smem constant byte address 0x4 - core index']
  #allocation1 [shape = 'u32[144,128]{1,0:T(1,128)}', space=vmem, size = 0x12000, scoped, tag = 'internal scratch']
  %s0 = inlined_call_operand.hbm [shape: f32[16,64], index: 0, kind: input, shape index: {}]
  %s1 = inlined_call_operand.hbm [shape: bf16[64,128], index: 1, kind: input, shape index: {}]
  %s2 = inlined_call_operand.vmem [shape: f32[1,128], index: 2, kind: input, shape index: {}]
  %s3 = inlined_call_operand.hbm [shape: f32[16,128], index: 3, kind: output, shape index: {}]
  %s4 = sld [smem:[#allocation0]]
  $region30: #{tpu_custom_call.1} parent=0
    _
  %s6 = ssub.s32 1, %s4
  %s7 = scalar_select 0, %s6, %s4
  $region1: #{tpu_custom_call.1} parent=0
    #allocation2 [shape = 'u8[8192]{0}', space=vmem, size = 0x2000, scoped, tag = 'input window, operand 0, single buffered']
    #allocation3 [shape = 's32[1]{0}', space=sflag, size = 0x4, scoped, tag = 'scoped memory for tpu_custom_call.1']
    #allocation4 [shape = 's32[1]{0}', space=sflag, size = 0x4, scoped, tag = 'scoped memory for tpu_custom_call.1']
    #allocation5 [shape = 'u8[16384]{0}', space=vmem, size = 0x4000, scoped, tag = 'input window, operand 1, single buffered']
    #allocation6 [shape = 's32[1]{0}', space=sflag, size = 0x4, scoped, tag = 'scoped memory for tpu_custom_call.1']
    #allocation7 [shape = 'u8[8192]{0}', space=vmem, size = 0x2000, scoped, tag = 'output window, operand 0, single buffered']
    %8 = vsyncpa [#allocation3], 0
    %9 = vsyncpa [#allocation6], 0
    %10 = vsyncpa [#allocation4], 0
    // Predicated region
    $region2: #{tpu_custom_call.1} parent=1 // pred_check
      _
    $region3: #{tpu_custom_call.1} parent=1 // pred_check_branch
      %12 = sbr.rel (0) target = $region5
    $region4: #{tpu_custom_call.1} parent=1 // pred_region
      %s14 = ssub.s32 256, 256
      %15 = vsyncadd [#allocation3], %s14
      %s16 = sshll.u32 [#allocation2], 4
      %s17 = int_to_ptr.vmem [resolvable:$true] %s16
      %22 = dma.hbm_to_vmem [thread:$0]  %s0, 256, %s17, [#allocation3], 128, 128, 8
    $region5: #{tpu_custom_call.1} parent=1 // pred_fallthru
      _
    // Predicated region
    $region6: #{tpu_custom_call.1} parent=1 // pred_check
      _
    $region7: #{tpu_custom_call.1} parent=1 // pred_check_branch
      %24 = sbr.rel (0) target = $region9
    $region8: #{tpu_custom_call.1} parent=1 // pred_region
      %s26 = ssub.s32 512, 512
      %27 = vsyncadd [#allocation6], %s26
      %s28 = sshll.u32 [#allocation5], 4
      %s29 = int_to_ptr.vmem [resolvable:$true] %s28
      %34 = dma.hbm_to_vmem [thread:$0]  %s1, 512, %s29, [#allocation6], 64, 64, 4
    $region9: #{tpu_custom_call.1} parent=1 // pred_fallthru
      _
    // Predicated region
    $region10: #{tpu_custom_call.1} parent=1 // pred_check
      _
    $region11: #{tpu_custom_call.1} parent=1 // pred_check_branch
      %36 = sbr.rel (0) target = $region13
    $region12: #{tpu_custom_call.1} parent=1 // pred_region
      _
    $region13: #{tpu_custom_call.1} parent=1 // pred_fallthru
      _
    // Predicated region
    $region14: #{tpu_custom_call.1} parent=1 // pred_check
      _
    $region15: #{tpu_custom_call.1} parent=1 // pred_check_branch
      %38 = sbr.rel (0) target = $region17
    $region16: #{tpu_custom_call.1} parent=1 // pred_region
      %39 = dma.done [#allocation3], 256
    $region17: #{tpu_custom_call.1} parent=1 // pred_fallthru
      _
    // Predicated region
    $region18: #{tpu_custom_call.1} parent=1 // pred_check
      _
    $region19: #{tpu_custom_call.1} parent=1 // pred_check_branch
      %41 = sbr.rel (0) target = $region21
    $region20: #{tpu_custom_call.1} parent=1 // pred_region
      %42 = dma.done [#allocation6], 512
    $region21: #{tpu_custom_call.1} parent=1 // pred_fallthru
      _
    %v44 = vld [vmem:[#allocation2] sm:$0xff]
    %v45 = vld [vmem:[#allocation2 + $0x8] sm:$0xff]
    %v46 = vpack.c.bf16 %v45, %v44
    %v47 = vld [vmem:[#allocation5] sm:$0xf]
    %v48 = vld [vmem:[#allocation5 + $0x4] sm:$0xf]
    %v49 = vld [vmem:[#allocation5 + $0x8] sm:$0xf]
    %v50 = vld [vmem:[#allocation5 + $0xc] sm:$0xf]
    %v51 = vld [vmem:[#allocation5 + $0x10] sm:$0xf]
    %v52 = vld [vmem:[#allocation5 + $0x14] sm:$0xf]
    %v53 = vld [vmem:[#allocation5 + $0x18] sm:$0xf]
    %v54 = vld [vmem:[#allocation5 + $0x1c] sm:$0xf]
    %v55 = vld [vmem:[%s2] sm:$0x1]
    %v57 = vlaneseq
    %v58 = vshrl.u32 %v57, 7
    %v59 = vsub.s32 0, %v58
    %v60 = vrot.slane %v55, %v59
    %v70 = vunpack.c.l.b16 %v47
    %v71 = vunpack.c.l.b16 %v48
    %v72 = vunpack.c.l.b16 %v49
    %v73 = vunpack.c.l.b16 %v50
    %v74 = vunpack.c.l.b16 %v51
    %v75 = vunpack.c.l.b16 %v52
    %v76 = vunpack.c.l.b16 %v53
    %v77 = vunpack.c.l.b16 %v54
    %v78 = vpack.c.b16 %v71, %v70
    %v79 = vpack.c.b16 %v73, %v72
    %v80 = vpack.c.b16 %v75, %v74
    %v81 = vpack.c.b16 %v77, %v76
    %vm86 = vcmask 523264
    %v88 = vsel %vm86, %v46, 0
    %90 = vmatprep.subr.bf16.mxu0 0
    %91 = vmatpush1.bf16.msra.mxu0 0
    %92 = vmatprep.subr.bf16.mxu0 0
    %93 = vmatpush1.bf16.msra.mxu0 0
    %94 = vmatprep.subr.bf16.mxu0 0
    %95 = vmatpush1.bf16.msra.mxu0 0
    %96 = vmatprep.subr.bf16.mxu0 0
    %97 = vmatpush1.bf16.msra.mxu0 0
    %98 = vmatprep.subr.bf16.mxu0 0
    %99 = vmatpush1.bf16.msra.mxu0 %v81
    %100 = vmatprep.subr.bf16.mxu0 0
    %101 = vmatpush1.bf16.msra.mxu0 %v80
    %102 = vmatprep.subr.bf16.mxu0 0
    %103 = vmatpush1.bf16.msra.mxu0 %v79
    %104 = vmatprep.subr.bf16.mxu0 0
    %105 = vmatpush1.bf16.msra.mxu0 %v78
    %106 = vmatprep.subr.bf16.mxu0 0
    %107 = vmatpush2.bf16.msra.mxu0 0
    %108 = vmatprep.subr.bf16.mxu0 0
    %109 = vmatpush2.bf16.msra.mxu0 0
    %110 = vmatprep.subr.bf16.mxu0 0
    %111 = vmatpush2.bf16.msra.mxu0 0
    %112 = vmatprep.subr.bf16.mxu0 0
    %113 = vmatpush2.bf16.msra.mxu0 0
    %114 = vmatprep.subr.bf16.mxu0 0
    %115 = vmatpush2.bf16.msra.mxu0 0
    %116 = vmatprep.subr.bf16.mxu0 0
    %117 = vmatpush2.bf16.msra.mxu0 0
    %118 = vmatprep.subr.bf16.mxu0 0
    %119 = vmatpush2.bf16.msra.mxu0 0
    %120 = vmatprep.subr.bf16.mxu0 0
    %121 = vmatpush2.bf16.msra.mxu0 0
    %122 = vmatprep.mubr.bf16.mxu0 0
    %123 = vmatmul.mubr.bf16.gmra.mxu0 %v88
    %v124 = vpop.f32.mrf.mxu0
    %v125 = vadd.f32 %v60, %v124
    %v126 = vpop.f32.mrf.mxu0
    %v127 = vpop.f32.mrf.mxu0
    %v128 = vadd.f32 %v60, %v127
    %v129 = vpop.f32.mrf.mxu0
    %130 = vdwg.mxu0
    %131 = vst [vmem:[#allocation7] sm:$0xff] %v125
    %132 = vst [vmem:[#allocation7 + $0x8] sm:$0xff] %v128
    // Predicated region
    $region22: #{tpu_custom_call.1} parent=1 // pred_check
      _
    $region23: #{tpu_custom_call.1} parent=1 // pred_check_branch
      %134 = sbr.rel (0) target = $region25
    $region24: #{tpu_custom_call.1} parent=1 // pred_region
      %s136 = ssub.s32 256, 256
      %137 = vsyncadd [#allocation4], %s136
      %s138 = sshll.u32 [#allocation7], 4
      %s139 = int_to_ptr.vmem [resolvable:$true] %s138
      %144 = dma.vmem_to_hbm [thread:$0]  %s139, 256, %s3, [#allocation4], 128, 128, 8
    $region25: #{tpu_custom_call.1} parent=1 // pred_fallthru
      _
    // Predicated region
    $region26: #{tpu_custom_call.1} parent=1 // pred_check
      _
    $region27: #{tpu_custom_call.1} parent=1 // pred_check_branch
      %146 = sbr.rel (0) target = $region29
    $region28: #{tpu_custom_call.1} parent=1 // pred_region
      %147 = dma.done [#allocation4], 256
    $region29: #{tpu_custom_call.1} parent=1 // pred_fallthru
      _
    %148 = vsyncpa [#allocation3], 1
    %149 = vsyncpa [#allocation6], 1
    %150 = vsyncpa [#allocation4], 1

</llo_original>
